<compile_context>
chip_gen: v7x
topology: tpu7x:2x2x1
jax: 0.10.0
libtpu: 0.0.40
codegen_flags: <defaults>
</compile_context>

<pallas_src>
import functools

import jax
import jax.numpy as jnp
from jax.experimental import pallas as pl
from jax.experimental.pallas import tpu as pltpu


# Conservative per-call budget for pipelined block data.  Scoped-VMEM defaults
# are 16 MiB (v5e) / 32 MiB (v6e, v7x); physical VMEM is 128 MiB (v5e/v6e) /
# 64 MiB per TC (v7x).  32 MiB of block data + weights leaves headroom on
# every generation.
_VMEM_DATA_BUDGET = 32 * 1024 * 1024
_VMEM_LIMIT_CAP = 64 * 1024 * 1024  # never ask for more than v7x physical


def _largest_divisor_leq(n, cap):
    cap = max(1, min(n, cap))
    for d in range(cap, 0, -1):
        if n % d == 0:
            return d
    return 1


def _pick_hw_chunk(hw, c, itemsize, budget):
    """Largest HW chunk that is a multiple of 128, divides HW and fits budget."""
    best = None
    t = 128
    while t <= hw:
        if hw % t == 0 and 2 * 2 * c * t * itemsize <= budget:
            best = t
        t += 128
    return best


def _x_spec(shape, index_map, deep):
    """BlockSpec for the streamed activation blocks (optionally 3-deep)."""
    if deep:
        return pl.BlockSpec(shape, index_map, pipeline_mode=pl.Buffered(3))
    return pl.BlockSpec(shape, index_map)


# ----------------------------------------------------------------------------
# Fused kernels: pool + down(ReLU) + up(sigmoid) + scale on one resident block
# ----------------------------------------------------------------------------
def _se_fused_cmajor_kernel(x_ref, wd_ref, bd_ref, wu_ref, bu_ref, o_ref):
    # x_ref : (BN, C, HW)  channel-major, spatial flattened onto the lane axis
    # wd_ref: (C, Cint)    down 1x1-conv weight, pre-transposed to (in, out)
    # bd_ref: (1, Cint)    down bias
    # wu_ref: (C, Cint)    up 1x1-conv weight, (out, in) as stored by PyTorch
    # bu_ref: (1, C)       up bias
    x = x_ref[...]
    hw = x.shape[-1]                                               # static

    # Global average pool over the spatial (lane) axis; accumulate in f32 even
    # for bf16 inputs.
    pooled = jnp.sum(x.astype(jnp.float32), axis=-1) * (1.0 / hw)  # (BN, C)

    # Tiny FCs as VPU broadcast-mul + XLU reductions (exact f32, MXU stays out
    # of the critical path of this HBM-bound kernel).
    h = jnp.sum(pooled[:, :, None] * wd_ref[...], axis=1) + bd_ref[...]   # (BN, Cint)
    h = jnp.maximum(h, 0.0)
    z = jnp.sum(h[:, None, :] * wu_ref[...], axis=2) + bu_ref[...]        # (BN, C)
    gate = jax.nn.sigmoid(z).astype(x.dtype)                              # EUP exp/recip

    # Per-channel scale; gate broadcasts over the lane (spatial) axis.
    o_ref[...] = (x * gate[:, :, None]).astype(o_ref.dtype)


def _se_fused_clast_kernel(x_ref, wd_ref, bd_ref, wu_ref, bu_ref, o_ref):
    # x_ref : (BN, HW, C)  channels-last: C on the lane axis -> lane-dense vst
    x = x_ref[...]
    hw = x.shape[1]                                                # static

    pooled = jnp.sum(x.astype(jnp.float32), axis=1) * (1.0 / hw)   # (BN, C)
    h = jnp.sum(pooled[:, :, None] * wd_ref[...], axis=1) + bd_ref[...]   # (BN, Cint)
    h = jnp.maximum(h, 0.0)
    z = jnp.sum(h[:, None, :] * wu_ref[...], axis=2) + bu_ref[...]        # (BN, C)
    gate = jax.nn.sigmoid(z).astype(x.dtype)

    # Gate broadcasts along sublanes (spatial); stores are lane-dense over C.
    o_ref[...] = (x * gate[:, None, :]).astype(o_ref.dtype)


# ----------------------------------------------------------------------------
# Two-pass spatially-split path (plane too large for VMEM)
# ----------------------------------------------------------------------------
def _se_gate_kernel(hw_total, x_ref, wd_ref, bd_ref, wu_ref, bu_ref,
                    gate_ref, acc_ref):
    # Pass 1: accumulate the per-channel spatial sum across HW chunks, compute
    # the sigmoid gate on the last chunk.  gate_ref block stays resident across
    # the (last, "arbitrary") chunk axis.
    s = pl.program_id(1)

    @pl.when(s == 0)
    def _():
        acc_ref[...] = jnp.zeros_like(acc_ref)

    x = x_ref[0]                                                    # (C, THW)
    acc_ref[...] += jnp.sum(x.astype(jnp.float32), axis=1, keepdims=True)

    @pl.when(s == pl.num_programs(1) - 1)
    def _():
        pooled = acc_ref[...] * (1.0 / hw_total)                    # (C, 1)
        h = jnp.sum(wd_ref[...] * pooled, axis=0, keepdims=True) + bd_ref[...]
        h = jnp.maximum(h, 0.0)                                     # (1, Cint)
        z = jnp.sum(wu_ref[...] * h, axis=1, keepdims=True) + bu_ref[...]
        gate_ref[0] = jax.nn.sigmoid(z)                             # (C, 1) f32


def _se_scale_kernel(x_ref, gate_ref, o_ref):
    # Pass 2: stream HW chunks and apply the per-channel scale.
    x = x_ref[0]                                                    # (C, THW)
    gate = gate_ref[0].astype(x.dtype)                              # (C, 1)
    o_ref[0] = (x * gate).astype(o_ref.dtype)


# ----------------------------------------------------------------------------
# Wrapper
# ----------------------------------------------------------------------------
def se_block_pallas(x_nchw, w_down, b_down, w_up, b_up, *,
                    vmem_data_budget_bytes=_VMEM_DATA_BUDGET,
                    donate_input=False):
    """SEBlock forward.

    x_nchw : (N, C, H, W)
    w_down : (Cint, C, 1, 1), b_down: (Cint,)
    w_up   : (C, Cint, 1, 1), b_up  : (C,)
    """
    N, C, H, W = x_nchw.shape
    Cint = w_down.shape[0]
    HW = H * W
    dtype = x_nchw.dtype
    itemsize = jnp.dtype(dtype).itemsize
    plane_bytes = C * HW * itemsize
    weight_bytes = (2 * C * Cint + Cint + C) * 4
    gate_flops = N * (4 * C * Cint + C + Cint)

    # Tiny weights, prepared once (free reshapes / tiny transposes).
    wd = jnp.transpose(w_down.reshape(Cint, C)).astype(jnp.float32)   # (C, Cint)
    bd = b_down.reshape(1, Cint).astype(jnp.float32)
    wu = w_up.reshape(C, Cint).astype(jnp.float32)                    # (C, Cint)

    # Channel-major view of the NCHW buffer (pure reshape, no HBM copy).
    x2 = x_nchw.reshape(N, C, HW)

    io_alias = {0: 0} if donate_input else {}

    fits_fused = 2 * 2 * plane_bytes <= vmem_data_budget_bytes

    if fits_fused:
        # ------------------- single fused pass ---------------------------
        bn_cap = max(1, vmem_data_budget_bytes // (2 * 2 * plane_bytes))
        bn = _largest_divisor_leq(N, bn_cap)
        steps = N // bn
        deep = steps >= 4 and 2 * 3 * bn * plane_bytes <= vmem_data_budget_bytes
        n_buf = 3 if deep else 2
        data_bytes = 2 * n_buf * bn * plane_bytes

        # Lane-dense-store layout: for small spatial extents that are not lane
        # multiples (7x7 / 14x14 SE stages) with lane-sized C, put C on the
        # lane axis so stores are unmasked vst.
        channels_last = (HW % 128 != 0) and (C % 128 == 0)

        bu_row = b_up.reshape(1, C).astype(jnp.float32)

        compiler_params = pltpu.CompilerParams(
            dimension_semantics=("parallel",),
            vmem_limit_bytes=int(min(
                _VMEM_LIMIT_CAP,
                max(8 << 20, data_bytes + weight_bytes + (2 << 20)))))
        cost = pl.CostEstimate(
            flops=int(2 * N * C * HW + gate_flops),
            transcendentals=int(N * C),
            bytes_accessed=int(2 * N * plane_bytes + weight_bytes))

        weight_specs = [
            pl.BlockSpec((C, Cint), lambda n: (0, 0)),
            pl.BlockSpec((1, Cint), lambda n: (0, 0)),
            pl.BlockSpec((C, Cint), lambda n: (0, 0)),
            pl.BlockSpec((1, C), lambda n: (0, 0)),
        ]

        if channels_last:
            # TODO(synk): the NCHW->NHWC transpose below is an extra HBM
            # round-trip; skip it when the caller already holds NHWC data.
            x_in = jnp.transpose(x2, (0, 2, 1))                     # (N, HW, C)
            out = pl.pallas_call(
                _se_fused_clast_kernel,
                out_shape=jax.ShapeDtypeStruct((N, HW, C), dtype),
                grid=(steps,),
                in_specs=[_x_spec((bn, HW, C), lambda n: (n, 0, 0), deep)]
                         + weight_specs,
                out_specs=pl.BlockSpec((bn, HW, C), lambda n: (n, 0, 0)),
                compiler_params=compiler_params,
                cost_estimate=cost,
                input_output_aliases=io_alias,
            )(x_in, wd, bd, wu, bu_row)
            return jnp.transpose(out, (0, 2, 1)).reshape(N, C, H, W)

        out = pl.pallas_call(
            _se_fused_cmajor_kernel,
            out_shape=jax.ShapeDtypeStruct((N, C, HW), dtype),
            grid=(steps,),
            in_specs=[_x_spec((bn, C, HW), lambda n: (n, 0, 0), deep)]
                     + weight_specs,
            out_specs=pl.BlockSpec((bn, C, HW), lambda n: (n, 0, 0)),
            compiler_params=compiler_params,
            cost_estimate=cost,
            input_output_aliases=io_alias,
        )(x2, wd, bd, wu, bu_row)
        return out.reshape(N, C, H, W)

    # ----------------- two-pass spatially-split path ---------------------
    thw = _pick_hw_chunk(HW, C, itemsize, vmem_data_budget_bytes)
    if thw is None:
        # TODO(synk): HW has no 128-multiple divisor that fits; fall back to a
        # full-plane chunk (may exceed the scoped-VMEM budget on v7x).
        thw = HW
    n_chunks = HW // thw
    bu_col = b_up.reshape(C, 1).astype(jnp.float32)

    # Pass 1: pooled sum + gate.  Only x streams through VMEM; the (C, 1) gate
    # block is the resident accumulator output.
    p1_deep = (n_chunks >= 4 and
               3 * C * thw * itemsize <= vmem_data_budget_bytes)
    gate = pl.pallas_call(
        functools.partial(_se_gate_kernel, float(HW)),
        out_shape=jax.ShapeDtypeStruct((N, C, 1), jnp.float32),
        grid=(N, n_chunks),
        in_specs=[
            _x_spec((1, C, thw), lambda n, s: (n, 0, s), p1_deep),
            pl.BlockSpec((C, Cint), lambda n, s: (0, 0)),
            pl.BlockSpec((1, Cint), lambda n, s: (0, 0)),
            pl.BlockSpec((C, Cint), lambda n, s: (0, 0)),
            pl.BlockSpec((C, 1), lambda n, s: (0, 0)),
        ],
        out_specs=pl.BlockSpec((1, C, 1), lambda n, s: (n, 0, 0)),
        scratch_shapes=[pltpu.VMEM((C, 1), jnp.float32)],
        compiler_params=pltpu.CompilerParams(
            dimension_semantics=("parallel", "arbitrary"),
            vmem_limit_bytes=int(min(
                _VMEM_LIMIT_CAP,
                max(8 << 20, (3 if p1_deep else 2) * C * thw * itemsize
                    + weight_bytes + (2 << 20))))),
        cost_estimate=pl.CostEstimate(
            flops=int(N * C * HW + gate_flops),
            transcendentals=int(N * C),
            bytes_accessed=int(N * plane_bytes + weight_bytes + N * C * 4)),
    )(x2, wd, bd, wu, bu_col)

    # Pass 2: apply the per-channel scale, streaming x and out.
    p2_deep = (N * n_chunks >= 4 and
               2 * 3 * C * thw * itemsize <= vmem_data_budget_bytes)
    out = pl.pallas_call(
        _se_scale_kernel,
        out_shape=jax.ShapeDtypeStruct((N, C, HW), dtype),
        grid=(N, n_chunks),
        in_specs=[
            _x_spec((1, C, thw), lambda n, s: (n, 0, s), p2_deep),
            pl.BlockSpec((1, C, 1), lambda n, s: (n, 0, 0)),
        ],
        out_specs=pl.BlockSpec((1, C, thw), lambda n, s: (n, 0, s)),
        compiler_params=pltpu.CompilerParams(
            dimension_semantics=("parallel", "parallel"),
            vmem_limit_bytes=int(min(
                _VMEM_LIMIT_CAP,
                max(8 << 20, 2 * (3 if p2_deep else 2) * C * thw * itemsize
                    + N * C * 4 + (2 << 20))))),
        cost_estimate=pl.CostEstimate(
            flops=int(N * C * HW),
            transcendentals=0,
            bytes_accessed=int(2 * N * plane_bytes + N * C * 4)),
        input_output_aliases=io_alias,
    )(x2, gate)
    return out.reshape(N, C, H, W)


@functools.partial(jax.jit,
                   static_argnames=("vmem_data_budget_bytes", "donate_input"))
def se_forward(x, w_down, b_down, w_up, b_up, *,
               vmem_data_budget_bytes=_VMEM_DATA_BUDGET, donate_input=False):
    return se_block_pallas(x, w_down, b_down, w_up, b_up,
                           vmem_data_budget_bytes=vmem_data_budget_bytes,
                           donate_input=donate_input)


# Pure-JAX reference (exact-f32 matmuls so the comparison is not polluted by
# default-precision MXU rounding).
def se_forward_ref(x, w_down, b_down, w_up, b_up):
    N, C, H, W = x.shape
    Cint = w_down.shape[0]
    pooled = jnp.mean(x.astype(jnp.float32), axis=(2, 3))                 # (N, C)
    h = jnp.maximum(
        jnp.matmul(pooled, w_down.reshape(Cint, C).T,
                   precision=jax.lax.Precision.HIGHEST) + b_down, 0.0)    # (N, Cint)
    g = jax.nn.sigmoid(
        jnp.matmul(h, w_up.reshape(C, Cint).T,
                   precision=jax.lax.Precision.HIGHEST) + b_up)           # (N, C)
    return x * g[:, :, None, None].astype(x.dtype)


if __name__ == "__main__":
    key = jax.random.PRNGKey(0)

    def make_inputs(k, N, C, H, W, Cint):
        kx, k1, k2, k3, k4 = jax.random.split(k, 5)
        x = jax.random.normal(kx, (N, C, H, W), dtype=jnp.float32)
        w_down = jax.random.normal(k1, (Cint, C, 1, 1), dtype=jnp.float32) * 0.5
        b_down = jax.random.normal(k2, (Cint,), dtype=jnp.float32) * 0.1
        w_up = jax.random.normal(k3, (C, Cint, 1, 1), dtype=jnp.float32) * 0.5
        b_up = jax.random.normal(k4, (C,), dtype=jnp.float32) * 0.1
        return x, w_down, b_down, w_up, b_up

    def check(args, **kw):
        out = jax.block_until_ready(se_forward(*args, **kw))
        ref = se_forward_ref(*args)
        assert out.shape == args[0].shape, out.shape
        err = jnp.max(jnp.abs(out - ref))
        assert jnp.allclose(out, ref, atol=1e-4, rtol=1e-4), f"mismatch, max err {err}"

    k0, k1, k2, k3 = jax.random.split(key, 4)

    # 1) Module-default small shapes: fused path, all samples in one block.
    check(make_inputs(k0, 2, 4, 16, 16, 8))
    # 2) Late-SE-stage shape (C=128, 7x7): lane-dense channels-last layout.
    check(make_inputs(k1, 2, 128, 7, 7, 16))
    # 3) Multi-step fused path with 3-deep input buffering (budget shrunk so
    #    BN=2 over N=8 -> 4 grid steps).
    check(make_inputs(k2, 8, 8, 16, 16, 4), vmem_data_budget_bytes=96 * 1024)
    # 4) Plane larger than the (artificially shrunk) budget: two-pass
    #    spatially-split path (pooled/gate pass + scale pass).
    check(make_inputs(k3, 2, 8, 16, 16, 4), vmem_data_budget_bytes=16 * 1024)

    print("KERNEL_OK")
</pallas_src>

<mosaic_0001>
module attributes {stable_mosaic.version = 11 : i64} {
  func.func @_se_fused_cmajor_kernel(%arg0: i32, %arg1: memref<2x4x256xf32, #tpu.memory_space<vmem>>, %arg2: memref<4x8xf32, #tpu.memory_space<vmem>>, %arg3: memref<1x8xf32, #tpu.memory_space<vmem>>, %arg4: memref<4x8xf32, #tpu.memory_space<vmem>>, %arg5: memref<1x4xf32, #tpu.memory_space<vmem>>, %arg6: memref<2x4x256xf32, #tpu.memory_space<vmem>>) attributes {dimension_semantics = [#tpu.dimension_semantics<parallel>], iteration_bounds = array<i64: 1>, scalar_prefetch = 0 : i64, scratch_operands = 0 : i64, tpu.core_type = #tpu.core_type<tc>, window_params = [{transform_indices = @transform_0, window_bounds = array<i64: 2, 4, 256>}, {pipeline_mode = #tpu.pipeline_mode<synchronous>, transform_indices = @transform_1, window_bounds = array<i64: 4, 8>}, {pipeline_mode = #tpu.pipeline_mode<synchronous>, transform_indices = @transform_2, window_bounds = array<i64: 1, 8>}, {pipeline_mode = #tpu.pipeline_mode<synchronous>, transform_indices = @transform_3, window_bounds = array<i64: 4, 8>}, {pipeline_mode = #tpu.pipeline_mode<synchronous>, transform_indices = @transform_4, window_bounds = array<i64: 1, 4>}, {transform_indices = @transform_5, window_bounds = array<i64: 2, 4, 256>}]} {
    %c0 = arith.constant 0 : index
    %c0_0 = arith.constant 0 : index
    %c0_1 = arith.constant 0 : index
    %0 = vector.load %arg1[%c0, %c0_0, %c0_1] : memref<2x4x256xf32, #tpu.memory_space<vmem>>, vector<2x4x256xf32>
    %cst = arith.constant dense<0.000000e+00> : vector<2x4xf32>
    %1 = vector.multi_reduction <add>, %0, %cst [2] : vector<2x4x256xf32> to vector<2x4xf32>
    %cst_2 = arith.constant 3.906250e-03 : f32
    %2 = vector.broadcast %cst_2 : f32 to vector<2x4xf32>
    %3 = arith.mulf %1, %2 : vector<2x4xf32>
    %4 = vector.shape_cast %3 : vector<2x4xf32> to vector<2x4x1xf32>
    %c0_3 = arith.constant 0 : index
    %c0_4 = arith.constant 0 : index
    %5 = vector.load %arg2[%c0_3, %c0_4] : memref<4x8xf32, #tpu.memory_space<vmem>>, vector<4x8xf32>
    %6 = vector.shape_cast %5 : vector<4x8xf32> to vector<1x4x8xf32>
    %7 = vector.broadcast %4 : vector<2x4x1xf32> to vector<2x4x8xf32>
    %8 = vector.broadcast %6 : vector<1x4x8xf32> to vector<2x4x8xf32>
    %9 = arith.mulf %7, %8 : vector<2x4x8xf32>
    %cst_5 = arith.constant dense<0.000000e+00> : vector<2x8xf32>
    %10 = vector.multi_reduction <add>, %9, %cst_5 [1] : vector<2x4x8xf32> to vector<2x8xf32>
    %c0_6 = arith.constant 0 : index
    %c0_7 = arith.constant 0 : index
    %11 = vector.load %arg3[%c0_6, %c0_7] : memref<1x8xf32, #tpu.memory_space<vmem>>, vector<1x8xf32>
    %12 = vector.broadcast %11 : vector<1x8xf32> to vector<2x8xf32>
    %13 = arith.addf %10, %12 : vector<2x8xf32>
    %cst_8 = arith.constant 0.000000e+00 : f32
    %14 = vector.broadcast %cst_8 : f32 to vector<2x8xf32>
    %15 = arith.maximumf %13, %14 : vector<2x8xf32>
    %16 = vector.shape_cast %15 : vector<2x8xf32> to vector<2x1x8xf32>
    %c0_9 = arith.constant 0 : index
    %c0_10 = arith.constant 0 : index
    %17 = vector.load %arg4[%c0_9, %c0_10] : memref<4x8xf32, #tpu.memory_space<vmem>>, vector<4x8xf32>
    %18 = vector.shape_cast %17 : vector<4x8xf32> to vector<1x4x8xf32>
    %19 = vector.broadcast %16 : vector<2x1x8xf32> to vector<2x4x8xf32>
    %20 = vector.broadcast %18 : vector<1x4x8xf32> to vector<2x4x8xf32>
    %21 = arith.mulf %19, %20 : vector<2x4x8xf32>
    %cst_11 = arith.constant dense<0.000000e+00> : vector<2x4xf32>
    %22 = vector.multi_reduction <add>, %21, %cst_11 [2] : vector<2x4x8xf32> to vector<2x4xf32>
    %c0_12 = arith.constant 0 : index
    %c0_13 = arith.constant 0 : index
    %23 = vector.load %arg5[%c0_12, %c0_13] : memref<1x4xf32, #tpu.memory_space<vmem>>, vector<1x4xf32>
    %24 = vector.broadcast %23 : vector<1x4xf32> to vector<2x4xf32>
    %25 = arith.addf %22, %24 : vector<2x4xf32>
    %26 = arith.negf %25 : vector<2x4xf32>
    %27 = math.exp %26 : vector<2x4xf32>
    %cst_14 = arith.constant 1.000000e+00 : f32
    %28 = vector.broadcast %cst_14 : f32 to vector<2x4xf32>
    %29 = arith.addf %28, %27 : vector<2x4xf32>
    %30 = arith.divf %28, %29 : vector<2x4xf32>
    %31 = vector.shape_cast %30 : vector<2x4xf32> to vector<2x4x1xf32>
    %32 = vector.broadcast %31 : vector<2x4x1xf32> to vector<2x4x256xf32>
    %33 = arith.mulf %0, %32 : vector<2x4x256xf32>
    %c0_15 = arith.constant 0 : index
    %c0_16 = arith.constant 0 : index
    %c0_17 = arith.constant 0 : index
    %34 = vector.load %arg6[%c0_15, %c0_16, %c0_17] : memref<2x4x256xf32, #tpu.memory_space<vmem>>, vector<2x4x256xf32>
    tpu.vector_store %arg6[%c0_15, %c0_16, %c0_17], %33 {strides = array<i32>} : memref<2x4x256xf32, #tpu.memory_space<vmem>>, vector<2x4x256xf32>,
    return
  }
  func.func @transform_0(%arg0: i32) -> (i32, i32, i32) {
    %c0_i32 = arith.constant 0 : i32
    %c0_i32_0 = arith.constant 0 : i32
    %c0_i32_1 = arith.constant 0 : i32
    return %arg0, %c0_i32, %c0_i32_0 : i32, i32, i32
  }
  func.func @transform_1(%arg0: i32) -> (i32, i32) {
    %c0_i32 = arith.constant 0 : i32
    %c0_i32_0 = arith.constant 0 : i32
    %c0_i32_1 = arith.constant 0 : i32
    return %c0_i32, %c0_i32_0 : i32, i32
  }
  func.func @transform_2(%arg0: i32) -> (i32, i32) {
    %c0_i32 = arith.constant 0 : i32
    %c0_i32_0 = arith.constant 0 : i32
    %c0_i32_1 = arith.constant 0 : i32
    return %c0_i32, %c0_i32_0 : i32, i32
  }
  func.func @transform_3(%arg0: i32) -> (i32, i32) {
    %c0_i32 = arith.constant 0 : i32
    %c0_i32_0 = arith.constant 0 : i32
    %c0_i32_1 = arith.constant 0 : i32
    return %c0_i32, %c0_i32_0 : i32, i32
  }
  func.func @transform_4(%arg0: i32) -> (i32, i32) {
    %c0_i32 = arith.constant 0 : i32
    %c0_i32_0 = arith.constant 0 : i32
    %c0_i32_1 = arith.constant 0 : i32
    return %c0_i32, %c0_i32_0 : i32, i32
  }
  func.func @transform_5(%arg0: i32) -> (i32, i32, i32) {
    %c0_i32 = arith.constant 0 : i32
    %c0_i32_0 = arith.constant 0 : i32
    %c0_i32_1 = arith.constant 0 : i32
    return %arg0, %c0_i32, %c0_i32_0 : i32, i32, i32
  }
}

</mosaic_0001>

<llo_original>
// kernel: se_forward.1
$region0: #{se_forward.1}
  #allocation0 [shape = 'u32[]', space=smem, size = 0x4, offset = 0x4, fixed_abs, tag = 'smem constant byte address 0x4 - core index']
  #allocation1 [shape = 'u32[144,128]{1,0:T(1,128)}', space=vmem, size = 0x12000, scoped, tag = 'internal scratch']
  %s0 = inlined_call_operand.vmem [shape: f32[2,4,256], index: 0, kind: input, shape index: {}]
  %s1 = inlined_call_operand.vmem [shape: f32[4,8], index: 1, kind: input, shape index: {}]
  %s2 = inlined_call_operand.vmem [shape: f32[1,8], index: 2, kind: input, shape index: {}]
  %s3 = inlined_call_operand.vmem [shape: f32[4,8], index: 3, kind: input, shape index: {}]
  %s4 = inlined_call_operand.vmem [shape: f32[1,4], index: 4, kind: input, shape index: {}]
  %s5 = inlined_call_operand.vmem [shape: f32[2,4,256], index: 5, kind: output, shape index: {}]
  %s6 = sld [smem:[#allocation0]]
  $region30: #{se_forward.1} parent=0
    _
  %s8 = ssub.s32 1, %s6
  %s9 = scalar_select 0, %s8, %s6
  // Predicated region
  $region2: #{se_forward.1} parent=0 // pred_check
    _
  $region3: #{se_forward.1} parent=0 // pred_check_branch
    %11 = sbr.rel (0) target = $region5
  $region4: #{se_forward.1} parent=0 // pred_region
    _
  $region5: #{se_forward.1} parent=0 // pred_fallthru
    _
  // Predicated region
  $region6: #{se_forward.1} parent=0 // pred_check
    _
  $region7: #{se_forward.1} parent=0 // pred_check_branch
    %13 = sbr.rel (0) target = $region9
  $region8: #{se_forward.1} parent=0 // pred_region
    _
  $region9: #{se_forward.1} parent=0 // pred_fallthru
    _
  // Predicated region
  $region10: #{se_forward.1} parent=0 // pred_check
    _
  $region11: #{se_forward.1} parent=0 // pred_check_branch
    %15 = sbr.rel (0) target = $region13
  $region12: #{se_forward.1} parent=0 // pred_region
    _
  $region13: #{se_forward.1} parent=0 // pred_fallthru
    _
  // Predicated region
  $region14: #{se_forward.1} parent=0 // pred_check
    _
  $region15: #{se_forward.1} parent=0 // pred_check_branch
    %17 = sbr.rel (0) target = $region17
  $region16: #{se_forward.1} parent=0 // pred_region
    _
  $region17: #{se_forward.1} parent=0 // pred_fallthru
    _
  // Predicated region
  $region18: #{se_forward.1} parent=0 // pred_check
    _
  $region19: #{se_forward.1} parent=0 // pred_check_branch
    %19 = sbr.rel (0) target = $region21
  $region20: #{se_forward.1} parent=0 // pred_region
    _
  $region21: #{se_forward.1} parent=0 // pred_fallthru
    _
  %v20 = vld [vmem:[%s0] sm:$0xff]
  %v21 = vld [vmem:[%s0 + $0x8] sm:$0xff]
  %v24 = vcombine.high %v20, %v20
  %v25 = vcombine.high %v21, %v21
  %vm28 = vcmask 1043456
  %v29 = vsel %vm28, %v20, 0.0
  %v30 = vsel %vm28, %v24, 0.0
  %v31 = vadd.f32 %v29, %v30
  %32 = vadd.xlane.f32.xlu0 %v31
  %v33 = vpop.xlane.xlu0 %32
  %v34 = vsel %vm28, %v21, 0.0
  %v35 = vsel %vm28, %v25, 0.0
  %v36 = vadd.f32 %v34, %v35
  %37 = vadd.xlane.f32.xlu0 %v36
  %v38 = vpop.xlane.xlu0 %37
  %v39 = vmul.f32 %v33, 0.00390625
  %v40 = vmul.f32 %v38, 0.00390625
  %v41 = vld [vmem:[%s1] sm:$0xf]
  %v42 = vmul.f32 %v39, %v41
  %v43 = vmul.f32 %v40, %v41
  %vm44 = vcmask 60416
  %v45 = vsel %vm44, %v42, 0.0
  %v46 = vrot.slane %v45, 4
  %v47 = vadd.f32 %v45, %v46
  %v48 = vrot.slane %v47, 2
  %v49 = vadd.f32 %v47, %v48
  %v50 = vrot.slane %v49, 1
  %v51 = vadd.f32 %v49, %v50
  %v52 = vsel %vm44, %v43, 0.0
  %v53 = vrot.slane %v52, 4
  %v54 = vadd.f32 %v52, %v53
  %v55 = vrot.slane %v54, 2
  %v56 = vadd.f32 %v54, %v55
  %v57 = vrot.slane %v56, 1
  %v58 = vadd.f32 %v56, %v57
  %v59 = vld [vmem:[%s2] sm:$0x1]
  %v61 = vlaneseq
  %v62 = vshrl.u32 %v61, 7
  %v63 = vsub.s32 0, %v62
  %v64 = vrot.slane %v59, %v63
  %v66 = vadd.f32 %v51, %v64
  %v67 = vadd.f32 %v58, %v64
  %v68 = vmax.f32 %v66, 0.0
  %v69 = vmax.f32 %v67, 0.0
  %v70 = vld [vmem:[%s3] sm:$0xf]
  %v71 = vlaneseq
  %v72 = vshrl.u32 %v71, 7
  %v73 = vsub.s32 0, %v72
  %v74 = vrot.slane %v68, %v73
  %v75 = vlaneseq
  %v76 = vshrl.u32 %v75, 7
  %v77 = vsub.s32 0, %v76
  %v78 = vrot.slane %v69, %v77
  %v79 = vmul.f32 %v74, %v70
  %v80 = vmul.f32 %v78, %v70
  %v81 = vsel %vm44, %v79, 0.0
  %82 = vadd.xlane.f32.xlu0 %v81
  %v83 = vpop.xlane.xlu0 %82
  %v84 = vsel %vm44, %v80, 0.0
  %85 = vadd.xlane.f32.xlu0 %v84
  %v86 = vpop.xlane.xlu0 %85
  %v87 = vld [vmem:[%s4] sm:$0x1]
  %v89 = vlaneseq
  %v90 = vshrl.u32 %v89, 7
  %v91 = vsub.s32 0, %v90
  %v92 = vrot.slane %v87, %v91
  %94 = vbcast.lane.b32.xlu0 %v92, 256
  %v95 = vpop.permute.xlu0 %94
  %v97 = vadd.f32 %v83, %v95
  %v98 = vadd.f32 %v86, %v95
  %v99 = vxor.u32 %v97, 2147483648
  %v100 = vxor.u32 %v98, 2147483648
  %v101 = vmul.f32 %v99, 1.442695
  %v102 = vpow.pop %v101
  %v103 = vmul.f32 %v100, 1.442695
  %v104 = vpow.pop %v103
  %v105 = vadd.f32 %v102, 1.0
  %v106 = vadd.f32 %v104, 1.0
  %v107 = vrcp.pop %v105
  %v108 = vmul.f32 1.0, %v107
  %v109 = vrcp.pop %v106
  %v110 = vmul.f32 1.0, %v109
  %112 = vset.pattern.permute.xlu0 0
  %113 = vperm.xlu0 %112, %v108
  %v114 = vpop.permute.xlu0 %113
  %116 = vset.pattern.permute.xlu0 0
  %117 = vperm.xlu0 %116, %v110
  %v118 = vpop.permute.xlu0 %117
  %v120 = vunpack.c.l.s4 839922192
  %v121 = vunpack.c.0.s8 %v120
  %v122 = vlaneseq
  %v123 = vshrl.u32 %v122, 7
  %v124 = vsub.s32 %v121, %v123
  %v125 = vrot.slane %v114, %v124
  %v127 = vunpack.c.l.s4 839922192
  %v128 = vunpack.c.0.s8 %v127
  %v129 = vlaneseq
  %v130 = vshrl.u32 %v129, 7
  %v131 = vsub.s32 %v128, %v130
  %v132 = vrot.slane %v118, %v131
  %v135 = vmul.f32 %v20, %v125
  %v136 = vmul.f32 %v21, %v132
  %137 = vst [vmem:[%s5] sm:$0xff] %v135
  %138 = vst [vmem:[%s5 + $0x8] sm:$0xff] %v136
  // Predicated region
  $region22: #{se_forward.1} parent=0 // pred_check
    _
  $region23: #{se_forward.1} parent=0 // pred_check_branch
    %140 = sbr.rel (0) target = $region25
  $region24: #{se_forward.1} parent=0 // pred_region
    _
  $region25: #{se_forward.1} parent=0 // pred_fallthru
    _
  // Predicated region
  $region26: #{se_forward.1} parent=0 // pred_check
    _
  $region27: #{se_forward.1} parent=0 // pred_check_branch
    %142 = sbr.rel (0) target = $region29
  $region28: #{se_forward.1} parent=0 // pred_region
    _
  $region29: #{se_forward.1} parent=0 // pred_fallthru
    _

</llo_original>
